<compile_context>
chip_gen: v5e
topology: v5e:2x2
jax: 0.10.0
libtpu: 0.0.40
codegen_flags: <defaults>
</compile_context>

<pallas_src>
import functools

import numpy as np

import jax
import jax.numpy as jnp
from jax.experimental import pallas as pl
from jax.experimental.pallas import tpu as pltpu


# --------------------------------------------------------------------------
# Host-side static helpers
# --------------------------------------------------------------------------

def _row_order(n_rows, tree_levels):
    """Row permutation produced by the in-kernel interleave-free tree.

    Output row r of the kernel's tree holds the data of input (flat) row
    order[r].  Purely structural, so it is computed once on the host.
    """
    def rec(idx, level):
        even, odd = idx[0::2], idx[1::2]
        if level + 1 < tree_levels:
            even = rec(even, level + 1)
            odd = rec(odd, level + 1)
        return np.concatenate([even, odd])
    return rec(np.arange(n_rows), 0)


def _default_steps(batch):
    """2 grid steps on a 2-TensorCore v7x chip (one batch half per TC via
    dimension_semantics='parallel'); 1 step on single-TC v5e/v6e (whole batch
    folded along sublanes into one kernel invocation)."""
    try:
        kind = jax.devices()[0].device_kind.lower()
    except Exception:
        return 1
    if ("v7" in kind or "7x" in kind) and batch % 2 == 0:
        return 2
    return 1


def pack_params(params, *, tree_levels, K, T, batch_fold):
    """Host-side weight packing (done once, outside jit).

    * wq: per tree node, two fused block-diagonal conv weights
          (phi|psi and eta|rho), each (K*2D, 2D) so a single matmul computes
          both branch convolutions over all K taps.
    * bq: matching fused biases (1, 2D).
    * wt: kron(I_batch_fold, w_time) with its columns permuted by the tree's
          static row order (compensates the missing in-kernel interleaves).
    """
    w_all = np.asarray(params["w_all"], np.float32)    # (4*n_nodes, K, D, D)
    b_all = np.asarray(params["b_all"], np.float32)    # (4*n_nodes, 1, D)
    w_time = np.asarray(params["w_time"], np.float32)  # (out_len, T)
    w_feat = np.asarray(params["w_feat"], np.float32)  # (D, out_dim)
    b_feat = np.asarray(params["b_feat"], np.float32)  # (1, out_dim)

    n_nodes = 2 ** tree_levels - 1
    D = w_all.shape[-1]
    wq = np.zeros((2 * n_nodes, K * 2 * D, 2 * D), np.float32)
    bq = np.zeros((2 * n_nodes, 1, 2 * D), np.float32)
    for node in range(n_nodes):                       # breadth-first node id
        ci = 4 * node                                 # (phi, psi, eta, rho)
        for pair, (ia, ib) in enumerate(((ci + 0, ci + 1), (ci + 2, ci + 3))):
            q = 2 * node + pair
            for k in range(K):
                wq[q, k * 2 * D:k * 2 * D + D, :D] = w_all[ia, k]
                wq[q, k * 2 * D + D:(k + 1) * 2 * D, D:] = w_all[ib, k]
            bq[q, 0, :D] = b_all[ia, 0]
            bq[q, 0, D:] = b_all[ib, 0]

    order = _row_order(batch_fold * T, tree_levels)
    wt = np.kron(np.eye(batch_fold, dtype=np.float32), w_time)[:, order]

    return {
        "wq": jnp.asarray(wq),
        "bq": jnp.asarray(bq),
        "wt": jnp.asarray(wt),
        "wf": jnp.asarray(w_feat),
        "bf": jnp.asarray(b_feat),
    }


# --------------------------------------------------------------------------
# Fused Pallas kernel: full STINet tree + residual + decoder per grid step.
# `batch_fold` batch elements are folded along the sublane (row) axis.
# --------------------------------------------------------------------------

def _stinet_kernel(x_ref, xp_ref, wq_ref, bq_ref, wt_ref, wf_ref, bf_ref,
                   o_ref, *scratch, K, tree_levels, batch_fold):
    f32 = jnp.float32
    D = x_ref.shape[1]
    nb = batch_fold
    pad = K // 2

    def shift_taps(v):
        """(rows, W) -> (rows, K*W): lane-concat of the K 'same'-padded time
        shifts of v.  Built with sublane slices + concat and a handful of
        iota-compare masks for the folded-batch boundaries (no MXU use)."""
        rows, width = v.shape
        th = rows // nb                         # per-batch sequence length
        ridx = None
        if nb > 1:
            ridx = jax.lax.broadcasted_iota(jnp.int32, (rows, width), 0)
        parts = []
        for k in range(K):
            sh = k - pad
            if sh == 0:
                parts.append(v)
                continue
            a = -sh if sh < 0 else sh
            zero = jnp.zeros((a, width), f32)
            if sh < 0:                           # shifted[t] = v[t - a]
                shifted = jnp.concatenate([zero, v[:rows - a, :]], axis=0)
                bad = [b * th + j for b in range(nb) for j in range(a)]
            else:                                # shifted[t] = v[t + a]
                shifted = jnp.concatenate([v[a:, :], zero], axis=0)
                bad = [b * th + th - 1 - j for b in range(nb) for j in range(a)]
            if nb > 1:
                m = None
                for off in bad:                  # zero rows that crossed a
                    eq = (ridx == off)           # folded-batch boundary
                    m = eq if m is None else jnp.logical_or(m, eq)
                shifted = jnp.where(m, 0.0, shifted)
            parts.append(shifted)
        return jnp.concatenate(parts, axis=-1)

    def sci_block(even, odd, node_id):
        """One interactive block; phi/psi and eta/rho each fused into a
        single matmul + a single tanh (and one exp) over the combined tile."""
        eo = jnp.concatenate([even, odd], axis=-1)                 # (r, 2D)
        g1 = jnp.dot(shift_taps(eo), wq_ref[2 * node_id].astype(f32),
                     preferred_element_type=f32)
        g1 = g1 + bq_ref[2 * node_id].astype(f32)
        e1 = jnp.exp(jnp.tanh(g1))                                 # (r, 2D)
        d = odd * e1[:, :D]                                        # phi gate
        c = even * e1[:, D:]                                       # psi gate
        dc = jnp.concatenate([d, c], axis=-1)
        t2 = jnp.dot(shift_taps(dc), wq_ref[2 * node_id + 1].astype(f32),
                     preferred_element_type=f32)
        t2 = jnp.tanh(t2 + bq_ref[2 * node_id + 1].astype(f32))
        even_out = c + t2[:, :D]                                   # eta
        odd_out = d - t2[:, D:]                                    # rho
        return even_out, odd_out

    def tree(src_ref, level, node):
        rows = src_ref.shape[0]
        half = rows // 2
        # even/odd split = sublane-strided loads (no selection matmuls).
        even = src_ref[pl.ds(0, half, stride=2), :].astype(f32)
        odd = src_ref[pl.ds(1, half, stride=2), :].astype(f32)
        node_id = (2 ** level - 1) + node
        even_out, odd_out = sci_block(even, odd, node_id)
        if level + 1 < tree_levels:
            s = scratch[level]                  # (half, D) VMEM scratch
            s[...] = even_out
            even_out = tree(s, level + 1, 2 * node)
            s[...] = odd_out
            odd_out = tree(s, level + 1, 2 * node + 1)
        # No interleave: the resulting static row permutation is compensated
        # on the host (pre-permuted residual input + permuted w_time columns).
        return jnp.concatenate([even_out, odd_out], axis=0)

    h = tree(x_ref, 0, 0)                       # (rows, D), tree row order
    h = h + xp_ref[...].astype(f32)             # residual (pre-permuted x)

    # Decoder: (batch-block-diag, column-permuted) time projection, then
    # feature projection.
    y = jnp.dot(wt_ref[...].astype(f32), h, preferred_element_type=f32)
    z = jnp.dot(y, wf_ref[...].astype(f32), preferred_element_type=f32)
    z = z + bf_ref[...].astype(f32)
    o_ref[...] = z.astype(o_ref.dtype)


# --------------------------------------------------------------------------
# Wrapper: one pallas_call for the whole forward pass.
# --------------------------------------------------------------------------

def construction_model_forward(masked_batch, packed, *, num_levels,
                               tree_levels, K, steps):
    B, T, D = masked_batch.shape
    # mirrors: assert self.input_len % np.power(2, self.num_levels) == 0
    assert T % (2 ** num_levels) == 0
    assert T % (2 ** tree_levels) == 0
    assert B % steps == 0
    bs = B // steps                     # batch elements folded per grid step
    n0 = bs * T

    order = _row_order(n0, tree_levels)           # static numpy permutation
    x_f = masked_batch.reshape(steps, n0, D)      # batch folded along rows
    x_perm = x_f[:, order, :]                     # residual operand

    wq, bq = packed["wq"], packed["bq"]
    wt, wf, bf = packed["wt"], packed["wf"], packed["bf"]
    out_len = wt.shape[0] // bs
    out_dim = wf.shape[1]

    kern = functools.partial(_stinet_kernel, K=K, tree_levels=tree_levels,
                             batch_fold=bs)

    # One small VMEM scratch per tree level >= 1 (strided-split staging).
    scratch_shapes = [pltpu.VMEM((n0 >> l, D), jnp.float32)
                      for l in range(1, tree_levels)]

    out = pl.pallas_call(
        kern,
        out_shape=jax.ShapeDtypeStruct((steps, bs * out_len, out_dim),
                                       masked_batch.dtype),
        grid=(steps,),
        in_specs=[
            pl.BlockSpec((None, n0, D), lambda s: (s, 0, 0)),     # x (folded)
            pl.BlockSpec((None, n0, D), lambda s: (s, 0, 0)),     # x permuted
            pl.BlockSpec(wq.shape, lambda s: (0, 0, 0)),          # resident
            pl.BlockSpec(bq.shape, lambda s: (0, 0, 0)),          # resident
            pl.BlockSpec(wt.shape, lambda s: (0, 0)),             # resident
            pl.BlockSpec(wf.shape, lambda s: (0, 0)),             # resident
            pl.BlockSpec(bf.shape, lambda s: (0, 0)),             # resident
        ],
        out_specs=pl.BlockSpec((None, bs * out_len, out_dim),
                               lambda s: (s, 0, 0)),
        scratch_shapes=scratch_shapes,
        compiler_params=pltpu.CompilerParams(
            dimension_semantics=("parallel",)),
    )(x_f, x_perm, wq, bq, wt, wf, bf)

    return out.reshape(B, out_len, out_dim)


# --------------------------------------------------------------------------
# Pure-JAX reference (same math, plain XLA ops) for correctness checking.
# --------------------------------------------------------------------------

def _reference_forward(x, params, *, tree_levels, K):
    P = jax.lax.Precision.HIGHEST
    w_all, b_all = params["w_all"], params["b_all"]
    pad = K // 2

    def conv_same(src, ci):
        Tn = src.shape[1]
        xp = jnp.pad(src, ((0, 0), (pad, K - 1 - pad), (0, 0)))
        acc = sum(jnp.einsum("btd,de->bte", xp[:, k:k + Tn, :], w_all[ci, k],
                             precision=P) for k in range(K))
        return acc + b_all[ci]

    def tree(h, level, node):
        ci = 4 * ((2 ** level - 1) + node)
        even, odd = h[:, 0::2, :], h[:, 1::2, :]
        d = odd * jnp.exp(jnp.tanh(conv_same(even, ci + 0)))
        c = even * jnp.exp(jnp.tanh(conv_same(odd, ci + 1)))
        even_out = c + jnp.tanh(conv_same(d, ci + 2))
        odd_out = d - jnp.tanh(conv_same(c, ci + 3))
        if level + 1 < tree_levels:
            even_out = tree(even_out, level + 1, 2 * node)
            odd_out = tree(odd_out, level + 1, 2 * node + 1)
        B, Th, D = even_out.shape
        return jnp.stack([even_out, odd_out], axis=2).reshape(B, 2 * Th, D)

    h = tree(x, 0, 0) + x
    y = jnp.einsum("ol,bld->bod", params["w_time"], h, precision=P)
    z = jnp.einsum("bod,de->boe", y, params["w_feat"], precision=P)
    return z + params["b_feat"]


# --------------------------------------------------------------------------
# Deterministic parameter init (conv weights stacked: order per node is
# phi, psi, eta, rho; nodes in breadth-first tree order).
# --------------------------------------------------------------------------

def init_params(key, *, D, K, T, out_len, out_dim, tree_levels):
    n_nodes = 2 ** tree_levels - 1
    n_conv = 4 * n_nodes
    k_w, k_b, k1, k2, k3 = jax.random.split(key, 5)
    return {
        "w_all": 0.1 * jax.random.normal(k_w, (n_conv, K, D, D), jnp.float32),
        "b_all": 0.1 * jax.random.normal(k_b, (n_conv, 1, D), jnp.float32),
        "w_time": jax.random.normal(k1, (out_len, T), jnp.float32) / jnp.sqrt(T),
        "w_feat": jax.random.normal(k2, (D, out_dim), jnp.float32) / jnp.sqrt(D),
        "b_feat": 0.1 * jax.random.normal(k3, (1, out_dim), jnp.float32),
    }


# --------------------------------------------------------------------------
# Main
# --------------------------------------------------------------------------

if __name__ == "__main__":
    B = 2                      # batch
    INPUT_LEN = 16             # input_len
    INPUT_DIM = 8              # input_dim
    OUT_LEN = 16               # prediction_output_len (reconstruction)
    OUT_DIM = 8                # prediction_output_dim
    NUM_LEVELS = 4             # only used by the assert (16 % 2**4 == 0)
    TREE_LEVELS = 2            # internal splitting depth of the STINet tree
    K = 3                      # conv kernel size (tcn_extraction_ks single entry)

    key = jax.random.PRNGKey(0)
    k_x, k_p = jax.random.split(key)

    masked_batch = jax.random.normal(k_x, (B, INPUT_LEN, INPUT_DIM), jnp.float32)
    params = init_params(k_p, D=INPUT_DIM, K=K, T=INPUT_LEN,
                         out_len=OUT_LEN, out_dim=OUT_DIM,
                         tree_levels=TREE_LEVELS)

    steps = _default_steps(B)          # 2 on v7x (one batch half per TC), else 1
    packed = pack_params(params, tree_levels=TREE_LEVELS, K=K, T=INPUT_LEN,
                         batch_fold=B // steps)

    fwd = jax.jit(functools.partial(construction_model_forward,
                                    num_levels=NUM_LEVELS,
                                    tree_levels=TREE_LEVELS, K=K, steps=steps))
    out = jax.block_until_ready(fwd(masked_batch, packed))

    assert out.shape == (B, OUT_LEN, OUT_DIM), out.shape
    assert bool(jnp.all(jnp.isfinite(out)))

    ref = jax.block_until_ready(
        _reference_forward(masked_batch, params, tree_levels=TREE_LEVELS, K=K))
    max_err = float(jnp.max(jnp.abs(out - ref)))
    # Tightened vs. previous 2e-3 (all-f32 kernel against HIGHEST-precision ref).
    assert jnp.allclose(out, ref, rtol=1e-3, atol=1e-3), max_err

    print("KERNEL_OK")
</pallas_src>

<mosaic_0001>
module attributes {stable_mosaic.version = 11 : i64} {
  func.func @_stinet_kernel(%arg0: i32, %arg1: memref<1x32x8xf32, #tpu.memory_space<vmem>>, %arg2: memref<1x32x8xf32, #tpu.memory_space<vmem>>, %arg3: memref<6x48x16xf32, #tpu.memory_space<vmem>>, %arg4: memref<6x1x16xf32, #tpu.memory_space<vmem>>, %arg5: memref<32x32xf32, #tpu.memory_space<vmem>>, %arg6: memref<8x8xf32, #tpu.memory_space<vmem>>, %arg7: memref<1x8xf32, #tpu.memory_space<vmem>>, %arg8: memref<1x32x8xf32, #tpu.memory_space<vmem>>, %arg9: memref<16x8xf32, #tpu.memory_space<vmem>>) attributes {dimension_semantics = [#tpu.dimension_semantics<parallel>], iteration_bounds = array<i64: 1>, scalar_prefetch = 0 : i64, scratch_operands = 1 : i64, tpu.core_type = #tpu.core_type<tc>, window_params = [{transform_indices = @transform_0, window_bounds = array<i64: 1, 32, 8>}, {transform_indices = @transform_1, window_bounds = array<i64: 1, 32, 8>}, {pipeline_mode = #tpu.pipeline_mode<synchronous>, transform_indices = @transform_2, window_bounds = array<i64: 6, 48, 16>}, {pipeline_mode = #tpu.pipeline_mode<synchronous>, transform_indices = @transform_3, window_bounds = array<i64: 6, 1, 16>}, {pipeline_mode = #tpu.pipeline_mode<synchronous>, transform_indices = @transform_4, window_bounds = array<i64: 32, 32>}, {pipeline_mode = #tpu.pipeline_mode<synchronous>, transform_indices = @transform_5, window_bounds = array<i64: 8, 8>}, {pipeline_mode = #tpu.pipeline_mode<synchronous>, transform_indices = @transform_6, window_bounds = array<i64: 1, 8>}, {transform_indices = @transform_7, window_bounds = array<i64: 1, 32, 8>}]} {
    %c0 = arith.constant 0 : index
    %c0_0 = arith.constant 0 : index
    %c0_1 = arith.constant 0 : index
    %0 = tpu.strided_load %arg1[%c0, %c0_0, %c0_1] {strides = array<i32: 1, 2, 1>} : memref<1x32x8xf32, #tpu.memory_space<vmem>>, vector<1x16x8xf32>
    %1 = vector.shape_cast %0 : vector<1x16x8xf32> to vector<16x8xf32>
    %c0_2 = arith.constant 0 : index
    %c1 = arith.constant 1 : index
    %c0_3 = arith.constant 0 : index
    %2 = tpu.strided_load %arg1[%c0_2, %c1, %c0_3] {strides = array<i32: 1, 2, 1>} : memref<1x32x8xf32, #tpu.memory_space<vmem>>, vector<1x16x8xf32>
    %3 = vector.shape_cast %2 : vector<1x16x8xf32> to vector<16x8xf32>
    %4 = tpu.concatenate %1, %3 in 1 : vector<16x8xf32>, vector<16x8xf32> -> vector<16x16xf32>
    %5 = tpu.iota {dimensions = array<i32: 0>} : vector<16x16xi32>
    %cst = arith.constant 0.000000e+00 : f32
    %6 = vector.broadcast %cst : f32 to vector<1x16xf32>
    %7 = vector.extract_strided_slice %4 {offsets = [0, 0], sizes = [15, 16], strides = [1, 1]} : vector<16x16xf32> to vector<15x16xf32>
    %8 = tpu.concatenate %6, %7 in 0 : vector<1x16xf32>, vector<15x16xf32> -> vector<16x16xf32>
    %c0_i32 = arith.constant 0 : i32
    %9 = vector.broadcast %c0_i32 : i32 to vector<16x16xi32>
    %10 = arith.cmpi eq, %5, %9 : vector<16x16xi32>
    %c8_i32 = arith.constant 8 : i32
    %11 = vector.broadcast %c8_i32 : i32 to vector<16x16xi32>
    %12 = arith.cmpi eq, %5, %11 : vector<16x16xi32>
    %13 = arith.ori %10, %12 : vector<16x16xi1>
    %cst_4 = arith.constant 0.000000e+00 : f32
    %14 = vector.broadcast %cst_4 : f32 to vector<16x16xf32>
    %15 = arith.select %13, %14, %8 : vector<16x16xi1>, vector<16x16xf32>
    %cst_5 = arith.constant 0.000000e+00 : f32
    %16 = vector.broadcast %cst_5 : f32 to vector<1x16xf32>
    %17 = vector.extract_strided_slice %4 {offsets = [1, 0], sizes = [15, 16], strides = [1, 1]} : vector<16x16xf32> to vector<15x16xf32>
    %18 = tpu.concatenate %17, %16 in 0 : vector<15x16xf32>, vector<1x16xf32> -> vector<16x16xf32>
    %c7_i32 = arith.constant 7 : i32
    %19 = vector.broadcast %c7_i32 : i32 to vector<16x16xi32>
    %20 = arith.cmpi eq, %5, %19 : vector<16x16xi32>
    %c15_i32 = arith.constant 15 : i32
    %21 = vector.broadcast %c15_i32 : i32 to vector<16x16xi32>
    %22 = arith.cmpi eq, %5, %21 : vector<16x16xi32>
    %23 = arith.ori %20, %22 : vector<16x16xi1>
    %cst_6 = arith.constant 0.000000e+00 : f32
    %24 = vector.broadcast %cst_6 : f32 to vector<16x16xf32>
    %25 = arith.select %23, %24, %18 : vector<16x16xi1>, vector<16x16xf32>
    %26 = tpu.concatenate %15, %4, %25 in 1 : vector<16x16xf32>, vector<16x16xf32>, vector<16x16xf32> -> vector<16x48xf32>
    %c0_7 = arith.constant 0 : index
    %c0_8 = arith.constant 0 : index
    %c0_9 = arith.constant 0 : index
    %27 = vector.load %arg3[%c0_7, %c0_8, %c0_9] : memref<6x48x16xf32, #tpu.memory_space<vmem>>, vector<1x48x16xf32>
    %28 = vector.shape_cast %27 : vector<1x48x16xf32> to vector<48x16xf32>
    %cst_10 = arith.constant dense<0.000000e+00> : vector<16x16xf32>
    %29 = tpu.matmul %26, %28, %cst_10 {dimension_numbers = #tpu.dot_dimension_numbers<[1], [0], [0], [1], [0, 0, 1, 1], [], []>} : vector<16x48xf32>, vector<48x16xf32>, vector<16x16xf32> -> vector<16x16xf32>
    %c0_11 = arith.constant 0 : index
    %c0_12 = arith.constant 0 : index
    %c0_13 = arith.constant 0 : index
    %30 = vector.load %arg4[%c0_11, %c0_12, %c0_13] : memref<6x1x16xf32, #tpu.memory_space<vmem>>, vector<1x1x16xf32>
    %31 = vector.shape_cast %30 : vector<1x1x16xf32> to vector<1x16xf32>
    %32 = vector.broadcast %31 : vector<1x16xf32> to vector<16x16xf32>
    %33 = arith.addf %29, %32 : vector<16x16xf32>
    %34 = math.tanh %33 : vector<16x16xf32>
    %35 = math.exp %34 : vector<16x16xf32>
    %36 = vector.extract_strided_slice %35 {offsets = [0, 0], sizes = [16, 8], strides = [1, 1]} : vector<16x16xf32> to vector<16x8xf32>
    %37 = arith.mulf %3, %36 : vector<16x8xf32>
    %38 = vector.extract_strided_slice %35 {offsets = [0, 8], sizes = [16, 8], strides = [1, 1]} : vector<16x16xf32> to vector<16x8xf32>
    %39 = arith.mulf %1, %38 : vector<16x8xf32>
    %40 = tpu.concatenate %37, %39 in 1 : vector<16x8xf32>, vector<16x8xf32> -> vector<16x16xf32>
    %41 = tpu.iota {dimensions = array<i32: 0>} : vector<16x16xi32>
    %cst_14 = arith.constant 0.000000e+00 : f32
    %42 = vector.broadcast %cst_14 : f32 to vector<1x16xf32>
    %43 = vector.extract_strided_slice %40 {offsets = [0, 0], sizes = [15, 16], strides = [1, 1]} : vector<16x16xf32> to vector<15x16xf32>
    %44 = tpu.concatenate %42, %43 in 0 : vector<1x16xf32>, vector<15x16xf32> -> vector<16x16xf32>
    %c0_i32_15 = arith.constant 0 : i32
    %45 = vector.broadcast %c0_i32_15 : i32 to vector<16x16xi32>
    %46 = arith.cmpi eq, %41, %45 : vector<16x16xi32>
    %c8_i32_16 = arith.constant 8 : i32
    %47 = vector.broadcast %c8_i32_16 : i32 to vector<16x16xi32>
    %48 = arith.cmpi eq, %41, %47 : vector<16x16xi32>
    %49 = arith.ori %46, %48 : vector<16x16xi1>
    %cst_17 = arith.constant 0.000000e+00 : f32
    %50 = vector.broadcast %cst_17 : f32 to vector<16x16xf32>
    %51 = arith.select %49, %50, %44 : vector<16x16xi1>, vector<16x16xf32>
    %cst_18 = arith.constant 0.000000e+00 : f32
    %52 = vector.broadcast %cst_18 : f32 to vector<1x16xf32>
    %53 = vector.extract_strided_slice %40 {offsets = [1, 0], sizes = [15, 16], strides = [1, 1]} : vector<16x16xf32> to vector<15x16xf32>
    %54 = tpu.concatenate %53, %52 in 0 : vector<15x16xf32>, vector<1x16xf32> -> vector<16x16xf32>
    %c7_i32_19 = arith.constant 7 : i32
    %55 = vector.broadcast %c7_i32_19 : i32 to vector<16x16xi32>
    %56 = arith.cmpi eq, %41, %55 : vector<16x16xi32>
    %c15_i32_20 = arith.constant 15 : i32
    %57 = vector.broadcast %c15_i32_20 : i32 to vector<16x16xi32>
    %58 = arith.cmpi eq, %41, %57 : vector<16x16xi32>
    %59 = arith.ori %56, %58 : vector<16x16xi1>
    %cst_21 = arith.constant 0.000000e+00 : f32
    %60 = vector.broadcast %cst_21 : f32 to vector<16x16xf32>
    %61 = arith.select %59, %60, %54 : vector<16x16xi1>, vector<16x16xf32>
    %62 = tpu.concatenate %51, %40, %61 in 1 : vector<16x16xf32>, vector<16x16xf32>, vector<16x16xf32> -> vector<16x48xf32>
    %c1_22 = arith.constant 1 : index
    %c0_23 = arith.constant 0 : index
    %c0_24 = arith.constant 0 : index
    %63 = vector.load %arg3[%c1_22, %c0_23, %c0_24] : memref<6x48x16xf32, #tpu.memory_space<vmem>>, vector<1x48x16xf32>
    %64 = vector.shape_cast %63 : vector<1x48x16xf32> to vector<48x16xf32>
    %cst_25 = arith.constant dense<0.000000e+00> : vector<16x16xf32>
    %65 = tpu.matmul %62, %64, %cst_25 {dimension_numbers = #tpu.dot_dimension_numbers<[1], [0], [0], [1], [0, 0, 1, 1], [], []>} : vector<16x48xf32>, vector<48x16xf32>, vector<16x16xf32> -> vector<16x16xf32>
    %c1_26 = arith.constant 1 : index
    %c0_27 = arith.constant 0 : index
    %c0_28 = arith.constant 0 : index
    %66 = vector.load %arg4[%c1_26, %c0_27, %c0_28] : memref<6x1x16xf32, #tpu.memory_space<vmem>>, vector<1x1x16xf32>
    %67 = vector.shape_cast %66 : vector<1x1x16xf32> to vector<1x16xf32>
    %68 = vector.broadcast %67 : vector<1x16xf32> to vector<16x16xf32>
    %69 = arith.addf %65, %68 : vector<16x16xf32>
    %70 = math.tanh %69 : vector<16x16xf32>
    %71 = vector.extract_strided_slice %70 {offsets = [0, 0], sizes = [16, 8], strides = [1, 1]} : vector<16x16xf32> to vector<16x8xf32>
    %72 = arith.addf %39, %71 : vector<16x8xf32>
    %73 = vector.extract_strided_slice %70 {offsets = [0, 8], sizes = [16, 8], strides = [1, 1]} : vector<16x16xf32> to vector<16x8xf32>
    %74 = arith.subf %37, %73 : vector<16x8xf32>
    %c0_29 = arith.constant 0 : index
    %c0_30 = arith.constant 0 : index
    %75 = vector.load %arg9[%c0_29, %c0_30] : memref<16x8xf32, #tpu.memory_space<vmem>>, vector<16x8xf32>
    tpu.vector_store %arg9[%c0_29, %c0_30], %72 {strides = array<i32>} : memref<16x8xf32, #tpu.memory_space<vmem>>, vector<16x8xf32>,
    %c0_31 = arith.constant 0 : index
    %c0_32 = arith.constant 0 : index
    %76 = tpu.strided_load %arg9[%c0_31, %c0_32] {strides = array<i32: 2, 1>} : memref<16x8xf32, #tpu.memory_space<vmem>>, vector<8x8xf32>
    %c1_33 = arith.constant 1 : index
    %c0_34 = arith.constant 0 : index
    %77 = tpu.strided_load %arg9[%c1_33, %c0_34] {strides = array<i32: 2, 1>} : memref<16x8xf32, #tpu.memory_space<vmem>>, vector<8x8xf32>
    %78 = tpu.concatenate %76, %77 in 1 : vector<8x8xf32>, vector<8x8xf32> -> vector<8x16xf32>
    %79 = tpu.iota {dimensions = array<i32: 0>} : vector<8x16xi32>
    %cst_35 = arith.constant 0.000000e+00 : f32
    %80 = vector.broadcast %cst_35 : f32 to vector<1x16xf32>
    %81 = vector.extract_strided_slice %78 {offsets = [0, 0], sizes = [7, 16], strides = [1, 1]} : vector<8x16xf32> to vector<7x16xf32>
    %82 = tpu.concatenate %80, %81 in 0 : vector<1x16xf32>, vector<7x16xf32> -> vector<8x16xf32>
    %c0_i32_36 = arith.constant 0 : i32
    %83 = vector.broadcast %c0_i32_36 : i32 to vector<8x16xi32>
    %84 = arith.cmpi eq, %79, %83 : vector<8x16xi32>
    %c4_i32 = arith.constant 4 : i32
    %85 = vector.broadcast %c4_i32 : i32 to vector<8x16xi32>
    %86 = arith.cmpi eq, %79, %85 : vector<8x16xi32>
    %87 = arith.ori %84, %86 : vector<8x16xi1>
    %cst_37 = arith.constant 0.000000e+00 : f32
    %88 = vector.broadcast %cst_37 : f32 to vector<8x16xf32>
    %89 = arith.select %87, %88, %82 : vector<8x16xi1>, vector<8x16xf32>
    %cst_38 = arith.constant 0.000000e+00 : f32
    %90 = vector.broadcast %cst_38 : f32 to vector<1x16xf32>
    %91 = vector.extract_strided_slice %78 {offsets = [1, 0], sizes = [7, 16], strides = [1, 1]} : vector<8x16xf32> to vector<7x16xf32>
    %92 = tpu.concatenate %91, %90 in 0 : vector<7x16xf32>, vector<1x16xf32> -> vector<8x16xf32>
    %c3_i32 = arith.constant 3 : i32
    %93 = vector.broadcast %c3_i32 : i32 to vector<8x16xi32>
    %94 = arith.cmpi eq, %79, %93 : vector<8x16xi32>
    %c7_i32_39 = arith.constant 7 : i32
    %95 = vector.broadcast %c7_i32_39 : i32 to vector<8x16xi32>
    %96 = arith.cmpi eq, %79, %95 : vector<8x16xi32>
    %97 = arith.ori %94, %96 : vector<8x16xi1>
    %cst_40 = arith.constant 0.000000e+00 : f32
    %98 = vector.broadcast %cst_40 : f32 to vector<8x16xf32>
    %99 = arith.select %97, %98, %92 : vector<8x16xi1>, vector<8x16xf32>
    %100 = tpu.concatenate %89, %78, %99 in 1 : vector<8x16xf32>, vector<8x16xf32>, vector<8x16xf32> -> vector<8x48xf32>
    %c2 = arith.constant 2 : index
    %c0_41 = arith.constant 0 : index
    %c0_42 = arith.constant 0 : index
    %101 = vector.load %arg3[%c2, %c0_41, %c0_42] : memref<6x48x16xf32, #tpu.memory_space<vmem>>, vector<1x48x16xf32>
    %102 = vector.shape_cast %101 : vector<1x48x16xf32> to vector<48x16xf32>
    %cst_43 = arith.constant dense<0.000000e+00> : vector<8x16xf32>
    %103 = tpu.matmul %100, %102, %cst_43 {dimension_numbers = #tpu.dot_dimension_numbers<[1], [0], [0], [1], [0, 0, 1, 1], [], []>} : vector<8x48xf32>, vector<48x16xf32>, vector<8x16xf32> -> vector<8x16xf32>
    %c2_44 = arith.constant 2 : index
    %c0_45 = arith.constant 0 : index
    %c0_46 = arith.constant 0 : index
    %104 = vector.load %arg4[%c2_44, %c0_45, %c0_46] : memref<6x1x16xf32, #tpu.memory_space<vmem>>, vector<1x1x16xf32>
    %105 = vector.shape_cast %104 : vector<1x1x16xf32> to vector<1x16xf32>
    %106 = vector.broadcast %105 : vector<1x16xf32> to vector<8x16xf32>
    %107 = arith.addf %103, %106 : vector<8x16xf32>
    %108 = math.tanh %107 : vector<8x16xf32>
    %109 = math.exp %108 : vector<8x16xf32>
    %110 = vector.extract_strided_slice %109 {offsets = [0, 0], sizes = [8, 8], strides = [1, 1]} : vector<8x16xf32> to vector<8x8xf32>
    %111 = arith.mulf %77, %110 : vector<8x8xf32>
    %112 = vector.extract_strided_slice %109 {offsets = [0, 8], sizes = [8, 8], strides = [1, 1]} : vector<8x16xf32> to vector<8x8xf32>
    %113 = arith.mulf %76, %112 : vector<8x8xf32>
    %114 = tpu.concatenate %111, %113 in 1 : vector<8x8xf32>, vector<8x8xf32> -> vector<8x16xf32>
    %115 = tpu.iota {dimensions = array<i32: 0>} : vector<8x16xi32>
    %cst_47 = arith.constant 0.000000e+00 : f32
    %116 = vector.broadcast %cst_47 : f32 to vector<1x16xf32>
    %117 = vector.extract_strided_slice %114 {offsets = [0, 0], sizes = [7, 16], strides = [1, 1]} : vector<8x16xf32> to vector<7x16xf32>
    %118 = tpu.concatenate %116, %117 in 0 : vector<1x16xf32>, vector<7x16xf32> -> vector<8x16xf32>
    %c0_i32_48 = arith.constant 0 : i32
    %119 = vector.broadcast %c0_i32_48 : i32 to vector<8x16xi32>
    %120 = arith.cmpi eq, %115, %119 : vector<8x16xi32>
    %c4_i32_49 = arith.constant 4 : i32
    %121 = vector.broadcast %c4_i32_49 : i32 to vector<8x16xi32>
    %122 = arith.cmpi eq, %115, %121 : vector<8x16xi32>
    %123 = arith.ori %120, %122 : vector<8x16xi1>
    %cst_50 = arith.constant 0.000000e+00 : f32
    %124 = vector.broadcast %cst_50 : f32 to vector<8x16xf32>
    %125 = arith.select %123, %124, %118 : vector<8x16xi1>, vector<8x16xf32>
    %cst_51 = arith.constant 0.000000e+00 : f32
    %126 = vector.broadcast %cst_51 : f32 to vector<1x16xf32>
    %127 = vector.extract_strided_slice %114 {offsets = [1, 0], sizes = [7, 16], strides = [1, 1]} : vector<8x16xf32> to vector<7x16xf32>
    %128 = tpu.concatenate %127, %126 in 0 : vector<7x16xf32>, vector<1x16xf32> -> vector<8x16xf32>
    %c3_i32_52 = arith.constant 3 : i32
    %129 = vector.broadcast %c3_i32_52 : i32 to vector<8x16xi32>
    %130 = arith.cmpi eq, %115, %129 : vector<8x16xi32>
    %c7_i32_53 = arith.constant 7 : i32
    %131 = vector.broadcast %c7_i32_53 : i32 to vector<8x16xi32>
    %132 = arith.cmpi eq, %115, %131 : vector<8x16xi32>
    %133 = arith.ori %130, %132 : vector<8x16xi1>
    %cst_54 = arith.constant 0.000000e+00 : f32
    %134 = vector.broadcast %cst_54 : f32 to vector<8x16xf32>
    %135 = arith.select %133, %134, %128 : vector<8x16xi1>, vector<8x16xf32>
    %136 = tpu.concatenate %125, %114, %135 in 1 : vector<8x16xf32>, vector<8x16xf32>, vector<8x16xf32> -> vector<8x48xf32>
    %c3 = arith.constant 3 : index
    %c0_55 = arith.constant 0 : index
    %c0_56 = arith.constant 0 : index
    %137 = vector.load %arg3[%c3, %c0_55, %c0_56] : memref<6x48x16xf32, #tpu.memory_space<vmem>>, vector<1x48x16xf32>
    %138 = vector.shape_cast %137 : vector<1x48x16xf32> to vector<48x16xf32>
    %cst_57 = arith.constant dense<0.000000e+00> : vector<8x16xf32>
    %139 = tpu.matmul %136, %138, %cst_57 {dimension_numbers = #tpu.dot_dimension_numbers<[1], [0], [0], [1], [0, 0, 1, 1], [], []>} : vector<8x48xf32>, vector<48x16xf32>, vector<8x16xf32> -> vector<8x16xf32>
    %c3_58 = arith.constant 3 : index
    %c0_59 = arith.constant 0 : index
    %c0_60 = arith.constant 0 : index
    %140 = vector.load %arg4[%c3_58, %c0_59, %c0_60] : memref<6x1x16xf32, #tpu.memory_space<vmem>>, vector<1x1x16xf32>
    %141 = vector.shape_cast %140 : vector<1x1x16xf32> to vector<1x16xf32>
    %142 = vector.broadcast %141 : vector<1x16xf32> to vector<8x16xf32>
    %143 = arith.addf %139, %142 : vector<8x16xf32>
    %144 = math.tanh %143 : vector<8x16xf32>
    %145 = vector.extract_strided_slice %144 {offsets = [0, 0], sizes = [8, 8], strides = [1, 1]} : vector<8x16xf32> to vector<8x8xf32>
    %146 = arith.addf %113, %145 : vector<8x8xf32>
    %147 = vector.extract_strided_slice %144 {offsets = [0, 8], sizes = [8, 8], strides = [1, 1]} : vector<8x16xf32> to vector<8x8xf32>
    %148 = arith.subf %111, %147 : vector<8x8xf32>
    %149 = tpu.concatenate %146, %148 in 0 : vector<8x8xf32>, vector<8x8xf32> -> vector<16x8xf32>
    %c0_61 = arith.constant 0 : index
    %c0_62 = arith.constant 0 : index
    %150 = vector.load %arg9[%c0_61, %c0_62] : memref<16x8xf32, #tpu.memory_space<vmem>>, vector<16x8xf32>
    tpu.vector_store %arg9[%c0_61, %c0_62], %74 {strides = array<i32>} : memref<16x8xf32, #tpu.memory_space<vmem>>, vector<16x8xf32>,
    %c0_63 = arith.constant 0 : index
    %c0_64 = arith.constant 0 : index
    %151 = tpu.strided_load %arg9[%c0_63, %c0_64] {strides = array<i32: 2, 1>} : memref<16x8xf32, #tpu.memory_space<vmem>>, vector<8x8xf32>
    %c1_65 = arith.constant 1 : index
    %c0_66 = arith.constant 0 : index
    %152 = tpu.strided_load %arg9[%c1_65, %c0_66] {strides = array<i32: 2, 1>} : memref<16x8xf32, #tpu.memory_space<vmem>>, vector<8x8xf32>
    %153 = tpu.concatenate %151, %152 in 1 : vector<8x8xf32>, vector<8x8xf32> -> vector<8x16xf32>
    %154 = tpu.iota {dimensions = array<i32: 0>} : vector<8x16xi32>
    %cst_67 = arith.constant 0.000000e+00 : f32
    %155 = vector.broadcast %cst_67 : f32 to vector<1x16xf32>
    %156 = vector.extract_strided_slice %153 {offsets = [0, 0], sizes = [7, 16], strides = [1, 1]} : vector<8x16xf32> to vector<7x16xf32>
    %157 = tpu.concatenate %155, %156 in 0 : vector<1x16xf32>, vector<7x16xf32> -> vector<8x16xf32>
    %c0_i32_68 = arith.constant 0 : i32
    %158 = vector.broadcast %c0_i32_68 : i32 to vector<8x16xi32>
    %159 = arith.cmpi eq, %154, %158 : vector<8x16xi32>
    %c4_i32_69 = arith.constant 4 : i32
    %160 = vector.broadcast %c4_i32_69 : i32 to vector<8x16xi32>
    %161 = arith.cmpi eq, %154, %160 : vector<8x16xi32>
    %162 = arith.ori %159, %161 : vector<8x16xi1>
    %cst_70 = arith.constant 0.000000e+00 : f32
    %163 = vector.broadcast %cst_70 : f32 to vector<8x16xf32>
    %164 = arith.select %162, %163, %157 : vector<8x16xi1>, vector<8x16xf32>
    %cst_71 = arith.constant 0.000000e+00 : f32
    %165 = vector.broadcast %cst_71 : f32 to vector<1x16xf32>
    %166 = vector.extract_strided_slice %153 {offsets = [1, 0], sizes = [7, 16], strides = [1, 1]} : vector<8x16xf32> to vector<7x16xf32>
    %167 = tpu.concatenate %166, %165 in 0 : vector<7x16xf32>, vector<1x16xf32> -> vector<8x16xf32>
    %c3_i32_72 = arith.constant 3 : i32
    %168 = vector.broadcast %c3_i32_72 : i32 to vector<8x16xi32>
    %169 = arith.cmpi eq, %154, %168 : vector<8x16xi32>
    %c7_i32_73 = arith.constant 7 : i32
    %170 = vector.broadcast %c7_i32_73 : i32 to vector<8x16xi32>
    %171 = arith.cmpi eq, %154, %170 : vector<8x16xi32>
    %172 = arith.ori %169, %171 : vector<8x16xi1>
    %cst_74 = arith.constant 0.000000e+00 : f32
    %173 = vector.broadcast %cst_74 : f32 to vector<8x16xf32>
    %174 = arith.select %172, %173, %167 : vector<8x16xi1>, vector<8x16xf32>
    %175 = tpu.concatenate %164, %153, %174 in 1 : vector<8x16xf32>, vector<8x16xf32>, vector<8x16xf32> -> vector<8x48xf32>
    %c4 = arith.constant 4 : index
    %c0_75 = arith.constant 0 : index
    %c0_76 = arith.constant 0 : index
    %176 = vector.load %arg3[%c4, %c0_75, %c0_76] : memref<6x48x16xf32, #tpu.memory_space<vmem>>, vector<1x48x16xf32>
    %177 = vector.shape_cast %176 : vector<1x48x16xf32> to vector<48x16xf32>
    %cst_77 = arith.constant dense<0.000000e+00> : vector<8x16xf32>
    %178 = tpu.matmul %175, %177, %cst_77 {dimension_numbers = #tpu.dot_dimension_numbers<[1], [0], [0], [1], [0, 0, 1, 1], [], []>} : vector<8x48xf32>, vector<48x16xf32>, vector<8x16xf32> -> vector<8x16xf32>
    %c4_78 = arith.constant 4 : index
    %c0_79 = arith.constant 0 : index
    %c0_80 = arith.constant 0 : index
    %179 = vector.load %arg4[%c4_78, %c0_79, %c0_80] : memref<6x1x16xf32, #tpu.memory_space<vmem>>, vector<1x1x16xf32>
    %180 = vector.shape_cast %179 : vector<1x1x16xf32> to vector<1x16xf32>
    %181 = vector.broadcast %180 : vector<1x16xf32> to vector<8x16xf32>
    %182 = arith.addf %178, %181 : vector<8x16xf32>
    %183 = math.tanh %182 : vector<8x16xf32>
    %184 = math.exp %183 : vector<8x16xf32>
    %185 = vector.extract_strided_slice %184 {offsets = [0, 0], sizes = [8, 8], strides = [1, 1]} : vector<8x16xf32> to vector<8x8xf32>
    %186 = arith.mulf %152, %185 : vector<8x8xf32>
    %187 = vector.extract_strided_slice %184 {offsets = [0, 8], sizes = [8, 8], strides = [1, 1]} : vector<8x16xf32> to vector<8x8xf32>
    %188 = arith.mulf %151, %187 : vector<8x8xf32>
    %189 = tpu.concatenate %186, %188 in 1 : vector<8x8xf32>, vector<8x8xf32> -> vector<8x16xf32>
    %190 = tpu.iota {dimensions = array<i32: 0>} : vector<8x16xi32>
    %cst_81 = arith.constant 0.000000e+00 : f32
    %191 = vector.broadcast %cst_81 : f32 to vector<1x16xf32>
    %192 = vector.extract_strided_slice %189 {offsets = [0, 0], sizes = [7, 16], strides = [1, 1]} : vector<8x16xf32> to vector<7x16xf32>
    %193 = tpu.concatenate %191, %192 in 0 : vector<1x16xf32>, vector<7x16xf32> -> vector<8x16xf32>
    %c0_i32_82 = arith.constant 0 : i32
    %194 = vector.broadcast %c0_i32_82 : i32 to vector<8x16xi32>
    %195 = arith.cmpi eq, %190, %194 : vector<8x16xi32>
    %c4_i32_83 = arith.constant 4 : i32
    %196 = vector.broadcast %c4_i32_83 : i32 to vector<8x16xi32>
    %197 = arith.cmpi eq, %190, %196 : vector<8x16xi32>
    %198 = arith.ori %195, %197 : vector<8x16xi1>
    %cst_84 = arith.constant 0.000000e+00 : f32
    %199 = vector.broadcast %cst_84 : f32 to vector<8x16xf32>
    %200 = arith.select %198, %199, %193 : vector<8x16xi1>, vector<8x16xf32>
    %cst_85 = arith.constant 0.000000e+00 : f32
    %201 = vector.broadcast %cst_85 : f32 to vector<1x16xf32>
    %202 = vector.extract_strided_slice %189 {offsets = [1, 0], sizes = [7, 16], strides = [1, 1]} : vector<8x16xf32> to vector<7x16xf32>
    %203 = tpu.concatenate %202, %201 in 0 : vector<7x16xf32>, vector<1x16xf32> -> vector<8x16xf32>
    %c3_i32_86 = arith.constant 3 : i32
    %204 = vector.broadcast %c3_i32_86 : i32 to vector<8x16xi32>
    %205 = arith.cmpi eq, %190, %204 : vector<8x16xi32>
    %c7_i32_87 = arith.constant 7 : i32
    %206 = vector.broadcast %c7_i32_87 : i32 to vector<8x16xi32>
    %207 = arith.cmpi eq, %190, %206 : vector<8x16xi32>
    %208 = arith.ori %205, %207 : vector<8x16xi1>
    %cst_88 = arith.constant 0.000000e+00 : f32
    %209 = vector.broadcast %cst_88 : f32 to vector<8x16xf32>
    %210 = arith.select %208, %209, %203 : vector<8x16xi1>, vector<8x16xf32>
    %211 = tpu.concatenate %200, %189, %210 in 1 : vector<8x16xf32>, vector<8x16xf32>, vector<8x16xf32> -> vector<8x48xf32>
    %c5 = arith.constant 5 : index
    %c0_89 = arith.constant 0 : index
    %c0_90 = arith.constant 0 : index
    %212 = vector.load %arg3[%c5, %c0_89, %c0_90] : memref<6x48x16xf32, #tpu.memory_space<vmem>>, vector<1x48x16xf32>
    %213 = vector.shape_cast %212 : vector<1x48x16xf32> to vector<48x16xf32>
    %cst_91 = arith.constant dense<0.000000e+00> : vector<8x16xf32>
    %214 = tpu.matmul %211, %213, %cst_91 {dimension_numbers = #tpu.dot_dimension_numbers<[1], [0], [0], [1], [0, 0, 1, 1], [], []>} : vector<8x48xf32>, vector<48x16xf32>, vector<8x16xf32> -> vector<8x16xf32>
    %c5_92 = arith.constant 5 : index
    %c0_93 = arith.constant 0 : index
    %c0_94 = arith.constant 0 : index
    %215 = vector.load %arg4[%c5_92, %c0_93, %c0_94] : memref<6x1x16xf32, #tpu.memory_space<vmem>>, vector<1x1x16xf32>
    %216 = vector.shape_cast %215 : vector<1x1x16xf32> to vector<1x16xf32>
    %217 = vector.broadcast %216 : vector<1x16xf32> to vector<8x16xf32>
    %218 = arith.addf %214, %217 : vector<8x16xf32>
    %219 = math.tanh %218 : vector<8x16xf32>
    %220 = vector.extract_strided_slice %219 {offsets = [0, 0], sizes = [8, 8], strides = [1, 1]} : vector<8x16xf32> to vector<8x8xf32>
    %221 = arith.addf %188, %220 : vector<8x8xf32>
    %222 = vector.extract_strided_slice %219 {offsets = [0, 8], sizes = [8, 8], strides = [1, 1]} : vector<8x16xf32> to vector<8x8xf32>
    %223 = arith.subf %186, %222 : vector<8x8xf32>
    %224 = tpu.concatenate %221, %223 in 0 : vector<8x8xf32>, vector<8x8xf32> -> vector<16x8xf32>
    %225 = tpu.concatenate %149, %224 in 0 : vector<16x8xf32>, vector<16x8xf32> -> vector<32x8xf32>
    %c0_95 = arith.constant 0 : index
    %c0_96 = arith.constant 0 : index
    %c0_97 = arith.constant 0 : index
    %226 = vector.load %arg2[%c0_95, %c0_96, %c0_97] : memref<1x32x8xf32, #tpu.memory_space<vmem>>, vector<1x32x8xf32>
    %227 = vector.shape_cast %226 : vector<1x32x8xf32> to vector<32x8xf32>
    %228 = arith.addf %225, %227 : vector<32x8xf32>
    %c0_98 = arith.constant 0 : index
    %c0_99 = arith.constant 0 : index
    %229 = vector.load %arg5[%c0_98, %c0_99] : memref<32x32xf32, #tpu.memory_space<vmem>>, vector<32x32xf32>
    %cst_100 = arith.constant dense<0.000000e+00> : vector<32x8xf32>
    %230 = tpu.matmul %229, %228, %cst_100 {dimension_numbers = #tpu.dot_dimension_numbers<[1], [0], [0], [1], [0, 0, 1, 1], [], []>} : vector<32x32xf32>, vector<32x8xf32>, vector<32x8xf32> -> vector<32x8xf32>
    %c0_101 = arith.constant 0 : index
    %c0_102 = arith.constant 0 : index
    %231 = vector.load %arg6[%c0_101, %c0_102] : memref<8x8xf32, #tpu.memory_space<vmem>>, vector<8x8xf32>
    %cst_103 = arith.constant dense<0.000000e+00> : vector<32x8xf32>
    %232 = tpu.matmul %230, %231, %cst_103 {dimension_numbers = #tpu.dot_dimension_numbers<[1], [0], [0], [1], [0, 0, 1, 1], [], []>} : vector<32x8xf32>, vector<8x8xf32>, vector<32x8xf32> -> vector<32x8xf32>
    %c0_104 = arith.constant 0 : index
    %c0_105 = arith.constant 0 : index
    %233 = vector.load %arg7[%c0_104, %c0_105] : memref<1x8xf32, #tpu.memory_space<vmem>>, vector<1x8xf32>
    %234 = vector.broadcast %233 : vector<1x8xf32> to vector<32x8xf32>
    %235 = arith.addf %232, %234 : vector<32x8xf32>
    %c0_106 = arith.constant 0 : index
    %c0_107 = arith.constant 0 : index
    %c0_108 = arith.constant 0 : index
    %236 = vector.load %arg8[%c0_106, %c0_107, %c0_108] : memref<1x32x8xf32, #tpu.memory_space<vmem>>, vector<1x32x8xf32>
    %237 = vector.shape_cast %236 : vector<1x32x8xf32> to vector<32x8xf32>
    %238 = vector.shape_cast %235 : vector<32x8xf32> to vector<1x32x8xf32>
    tpu.vector_store %arg8[%c0_106, %c0_107, %c0_108], %238 {strides = array<i32>} : memref<1x32x8xf32, #tpu.memory_space<vmem>>, vector<1x32x8xf32>,
    return
  }
  func.func @transform_0(%arg0: i32) -> (i32, i32, i32) {
    %c0_i32 = arith.constant 0 : i32
    %c0_i32_0 = arith.constant 0 : i32
    %c0_i32_1 = arith.constant 0 : i32
    return %arg0, %c0_i32, %c0_i32_0 : i32, i32, i32
  }
  func.func @transform_1(%arg0: i32) -> (i32, i32, i32) {
    %c0_i32 = arith.constant 0 : i32
    %c0_i32_0 = arith.constant 0 : i32
    %c0_i32_1 = arith.constant 0 : i32
    return %arg0, %c0_i32, %c0_i32_0 : i32, i32, i32
  }
  func.func @transform_2(%arg0: i32) -> (i32, i32, i32) {
    %c0_i32 = arith.constant 0 : i32
    %c0_i32_0 = arith.constant 0 : i32
    %c0_i32_1 = arith.constant 0 : i32
    %c0_i32_2 = arith.constant 0 : i32
    return %c0_i32, %c0_i32_0, %c0_i32_1 : i32, i32, i32
  }
  func.func @transform_3(%arg0: i32) -> (i32, i32, i32) {
    %c0_i32 = arith.constant 0 : i32
    %c0_i32_0 = arith.constant 0 : i32
    %c0_i32_1 = arith.constant 0 : i32
    %c0_i32_2 = arith.constant 0 : i32
    return %c0_i32, %c0_i32_0, %c0_i32_1 : i32, i32, i32
  }
  func.func @transform_4(%arg0: i32) -> (i32, i32) {
    %c0_i32 = arith.constant 0 : i32
    %c0_i32_0 = arith.constant 0 : i32
    %c0_i32_1 = arith.constant 0 : i32
    return %c0_i32, %c0_i32_0 : i32, i32
  }
  func.func @transform_5(%arg0: i32) -> (i32, i32) {
    %c0_i32 = arith.constant 0 : i32
    %c0_i32_0 = arith.constant 0 : i32
    %c0_i32_1 = arith.constant 0 : i32
    return %c0_i32, %c0_i32_0 : i32, i32
  }
  func.func @transform_6(%arg0: i32) -> (i32, i32) {
    %c0_i32 = arith.constant 0 : i32
    %c0_i32_0 = arith.constant 0 : i32
    %c0_i32_1 = arith.constant 0 : i32
    return %c0_i32, %c0_i32_0 : i32, i32
  }
  func.func @transform_7(%arg0: i32) -> (i32, i32, i32) {
    %c0_i32 = arith.constant 0 : i32
    %c0_i32_0 = arith.constant 0 : i32
    %c0_i32_1 = arith.constant 0 : i32
    return %arg0, %c0_i32, %c0_i32_0 : i32, i32, i32
  }
}

</mosaic_0001>

<llo_original>
// kernel: construction_model_forward.1
$region0: #{construction_model_forward.1}
  #allocation0 [shape = 'u32[]', space=smem, size = 0x4, offset = 0x4, fixed_abs, tag = 'smem constant byte address 0x4 - core index']
  #allocation1 [shape = 'u32[72,128]{1,0:T(1,128)}', space=vmem, size = 0x9000, scoped, tag = 'internal scratch']
  #allocation2 [shape = 'f32[16,8]{1,0:T(8,128)}', space=vmem, size = 0x2000, scoped, tag = 'scratch operand']
  %s0 = inlined_call_operand.vmem [shape: f32[1,32,8], index: 0, kind: input, shape index: {}]
  %s1 = inlined_call_operand.vmem [shape: f32[1,32,8], index: 1, kind: input, shape index: {}]
  %s2 = inlined_call_operand.vmem [shape: f32[6,48,16], index: 2, kind: input, shape index: {}]
  %s3 = inlined_call_operand.vmem [shape: f32[6,1,16], index: 3, kind: input, shape index: {}]
  %s4 = inlined_call_operand.vmem [shape: f32[32,32], index: 4, kind: input, shape index: {}]
  %s5 = inlined_call_operand.vmem [shape: f32[8,8], index: 5, kind: input, shape index: {}]
  %s6 = inlined_call_operand.vmem [shape: f32[1,8], index: 6, kind: input, shape index: {}]
  %s7 = inlined_call_operand.vmem [shape: f32[1,32,8], index: 7, kind: output, shape index: {}]
  %s8 = sld [smem:[#allocation0]]
  $region38: #{construction_model_forward.1} parent=0
    _
  %s10 = ssub.s32 1, %s8
  %s11 = scalar_select 0, %s10, %s8
  // Predicated region
  $region2: #{construction_model_forward.1} parent=0 // pred_check
    _
  $region3: #{construction_model_forward.1} parent=0 // pred_check_branch
    %13 = sbr.rel (0) target = $region5
  $region4: #{construction_model_forward.1} parent=0 // pred_region
    _
  $region5: #{construction_model_forward.1} parent=0 // pred_fallthru
    _
  // Predicated region
  $region6: #{construction_model_forward.1} parent=0 // pred_check
    _
  $region7: #{construction_model_forward.1} parent=0 // pred_check_branch
    %15 = sbr.rel (0) target = $region9
  $region8: #{construction_model_forward.1} parent=0 // pred_region
    _
  $region9: #{construction_model_forward.1} parent=0 // pred_fallthru
    _
  // Predicated region
  $region10: #{construction_model_forward.1} parent=0 // pred_check
    _
  $region11: #{construction_model_forward.1} parent=0 // pred_check_branch
    %17 = sbr.rel (0) target = $region13
  $region12: #{construction_model_forward.1} parent=0 // pred_region
    _
  $region13: #{construction_model_forward.1} parent=0 // pred_fallthru
    _
  // Predicated region
  $region14: #{construction_model_forward.1} parent=0 // pred_check
    _
  $region15: #{construction_model_forward.1} parent=0 // pred_check_branch
    %19 = sbr.rel (0) target = $region17
  $region16: #{construction_model_forward.1} parent=0 // pred_region
    _
  $region17: #{construction_model_forward.1} parent=0 // pred_fallthru
    _
  // Predicated region
  $region18: #{construction_model_forward.1} parent=0 // pred_check
    _
  $region19: #{construction_model_forward.1} parent=0 // pred_check_branch
    %21 = sbr.rel (0) target = $region21
  $region20: #{construction_model_forward.1} parent=0 // pred_region
    _
  $region21: #{construction_model_forward.1} parent=0 // pred_fallthru
    _
  // Predicated region
  $region22: #{construction_model_forward.1} parent=0 // pred_check
    _
  $region23: #{construction_model_forward.1} parent=0 // pred_check_branch
    %23 = sbr.rel (0) target = $region25
  $region24: #{construction_model_forward.1} parent=0 // pred_region
    _
  $region25: #{construction_model_forward.1} parent=0 // pred_fallthru
    _
  // Predicated region
  $region26: #{construction_model_forward.1} parent=0 // pred_check
    _
  $region27: #{construction_model_forward.1} parent=0 // pred_check_branch
    %25 = sbr.rel (0) target = $region29
  $region28: #{construction_model_forward.1} parent=0 // pred_region
    _
  $region29: #{construction_model_forward.1} parent=0 // pred_fallthru
    _
  %v26 = vld [vmem:[%s0] ss:$2 sm:$0xff]
  %s27 = scalar_lea.vmem %s0, 16
  %v28 = vld [vmem:[%s27] ss:$2 sm:$0xff]
  %s29 = scalar_lea.vmem %s0, 1
  %v30 = vld [vmem:[%s29] ss:$2 sm:$0xff]
  %s31 = scalar_lea.vmem %s0, 17
  %v32 = vld [vmem:[%s31] ss:$2 sm:$0xff]
  %35 = vrot.lane.b32.xlu0 %v30, 8
  %v36 = vpop.permute.xlu0 %35
  %37 = vrot.lane.b32.xlu0 %v32, 8
  %v38 = vpop.permute.xlu0 %37
  %vm41 = vcmask 64512
  %v42 = vsel %vm41, %v26, %v36
  %v43 = vsel %vm41, %v28, %v38
  %v44 = vlaneseq
  %v45 = vshrl.u32 %v44, 7
  %v46 = vadd.s32 %v45, 8
  %vm49 = vcmask 1040384
  %v50 = vrot.slane %v42, 7
  %v51 = vrot.slane %v43, 7
  %v52 = vsel %vm49, %v50, %v51
  %v55 = vsel %vm49, 0.0, %v50
  %vm56 = vcmp.eq.s32.totalorder %v45, 0
  %vm57 = vcmp.eq.s32.totalorder %v46, 0
  %vm58 = vcmp.eq.s32.totalorder %v45, 8
  %vm59 = vcmp.eq.s32.totalorder %v46, 8
  %vm60 = vmor %vm56, %vm58
  %vm61 = vmor %vm57, %vm59
  %v62 = vsel %vm60, 0.0, %v55
  %v63 = vsel %vm61, 0.0, %v52
  %vm64 = vcmask 1046528
  %v65 = vrot.slane %v42, 1
  %v66 = vrot.slane %v43, 1
  %v67 = vsel %vm64, %v65, %v66
  %v70 = vsel %vm64, %v66, 0.0
  %vm71 = vcmp.eq.s32.totalorder %v45, 7
  %vm72 = vcmp.eq.s32.totalorder %v46, 7
  %vm73 = vcmp.eq.s32.totalorder %v45, 15
  %vm74 = vcmp.eq.s32.totalorder %v46, 15
  %vm75 = vmor %vm71, %vm73
  %vm76 = vmor %vm72, %vm74
  %v77 = vsel %vm75, 0.0, %v67
  %v78 = vsel %vm76, 0.0, %v70
  %79 = vrot.lane.b32.xlu0 %v42, 16
  %v80 = vpop.permute.xlu0 %79
  %81 = vrot.lane.b32.xlu0 %v43, 16
  %v82 = vpop.permute.xlu0 %81
  %87 = vrot.lane.b32.xlu0 %v77, 32
  %v88 = vpop.permute.xlu0 %87
  %89 = vrot.lane.b32.xlu0 %v78, 32
  %v90 = vpop.permute.xlu0 %89
  %vm93 = vcmask 130048
  %v94 = vsel %vm93, %v62, %v80
  %v95 = vsel %vm93, %v63, %v82
  %vm96 = vcmask 261120
  %v97 = vsel %vm96, %v94, %v88
  %v98 = vsel %vm96, %v95, %v90
  %v99 = vld [vmem:[%s2] sm:$0xff]
  %v100 = vld [vmem:[%s2 + $0x8] sm:$0xff]
  %v101 = vld [vmem:[%s2 + $0x10] sm:$0xff]
  %v102 = vld [vmem:[%s2 + $0x18] sm:$0xff]
  %v103 = vld [vmem:[%s2 + $0x20] sm:$0xff]
  %v104 = vld [vmem:[%s2 + $0x28] sm:$0xff]
  %v105 = vld [vmem:[%s3] sm:$0x1]
  %v107 = vperm.slane %v105, 0
  %vm109 = vcmask 392192
  %v111 = vsel %vm109, %v97, 0
  %v114 = vsel %vm109, %v98, 0
  %116 = vmatpush.msra.mxu0 0.0
  %117 = vmatpush.msra.mxu0 0.0
  %118 = vmatpush.msra.mxu0 0.0
  %119 = vmatpush.msra.mxu0 0.0
  %120 = vmatpush.msra.mxu0 0.0
  %121 = vmatpush.msra.mxu0 0.0
  %122 = vmatpush.msra.mxu0 0.0
  %123 = vmatpush.msra.mxu0 0.0
  %124 = vmatpush.msra.mxu0 0.0
  %125 = vmatpush.msra.mxu0 0.0
  %126 = vmatpush.msra.mxu0 %v104
  %127 = vmatpush.msra.mxu0 %v103
  %128 = vmatpush.msra.mxu0 %v102
  %129 = vmatpush.msra.mxu0 %v101
  %130 = vmatpush.msra.mxu0 %v100
  %131 = vmatpush.msra.mxu0 %v99
  %132 = vmatmul.f32.gmra.mxu0 %v111
  %v133 = vpop.f32.mrf.mxu0
  %v134 = vadd.f32 %v107, %v133
  %135 = vmatmul.f32.gmra.mxu0 %v114
  %v136 = vpop.f32.mrf.mxu0
  %v137 = vadd.f32 %v107, %v136
  %138 = vdwg.mxu0
  %v139 = vtanh.pop %v134
  %v140 = vtanh.pop %v137
  %v141 = vmul.f32 %v139, 1.442695
  %v142 = vpow.pop %v141
  %v143 = vmul.f32 %v140, 1.442695
  %v144 = vpow.pop %v143
  %v145 = vmul.f32 %v30, %v142
  %v146 = vmul.f32 %v32, %v144
  %149 = vrot.lane.b32.xlu0 %v142, 120
  %v150 = vpop.permute.xlu0 %149
  %151 = vrot.lane.b32.xlu0 %v144, 120
  %v152 = vpop.permute.xlu0 %151
  %v155 = vmul.f32 %v26, %v150
  %v156 = vmul.f32 %v28, %v152
  %159 = vrot.lane.b32.xlu0 %v155, 8
  %v160 = vpop.permute.xlu0 %159
  %161 = vrot.lane.b32.xlu0 %v156, 8
  %v162 = vpop.permute.xlu0 %161
  %v165 = vsel %vm41, %v145, %v160
  %v166 = vsel %vm41, %v146, %v162
  %v169 = vrot.slane %v165, 7
  %v170 = vrot.slane %v166, 7
  %v171 = vsel %vm49, %v169, %v170
  %v174 = vsel %vm49, 0.0, %v169
  %v175 = vsel %vm60, 0.0, %v174
  %v176 = vsel %vm61, 0.0, %v171
  %v177 = vrot.slane %v165, 1
  %v178 = vrot.slane %v166, 1
  %v179 = vsel %vm64, %v177, %v178
  %v182 = vsel %vm64, %v178, 0.0
  %v183 = vsel %vm75, 0.0, %v179
  %v184 = vsel %vm76, 0.0, %v182
  %185 = vrot.lane.b32.xlu0 %v165, 16
  %v186 = vpop.permute.xlu0 %185
  %187 = vrot.lane.b32.xlu0 %v166, 16
  %v188 = vpop.permute.xlu0 %187
  %193 = vrot.lane.b32.xlu0 %v183, 32
  %v194 = vpop.permute.xlu0 %193
  %195 = vrot.lane.b32.xlu0 %v184, 32
  %v196 = vpop.permute.xlu0 %195
  %v199 = vsel %vm93, %v175, %v186
  %v200 = vsel %vm93, %v176, %v188
  %v201 = vsel %vm96, %v199, %v194
  %v202 = vsel %vm96, %v200, %v196
  %s203 = scalar_lea.vmem %s2, 48
  %v204 = vld [vmem:[%s203] sm:$0xff]
  %v205 = vld [vmem:[%s203 + $0x8] sm:$0xff]
  %v206 = vld [vmem:[%s203 + $0x10] sm:$0xff]
  %v207 = vld [vmem:[%s203 + $0x18] sm:$0xff]
  %v208 = vld [vmem:[%s203 + $0x20] sm:$0xff]
  %v209 = vld [vmem:[%s203 + $0x28] sm:$0xff]
  %s210 = scalar_lea.vmem %s3, 1
  %v211 = vld [vmem:[%s210] sm:$0x1]
  %v213 = vperm.slane %v211, 0
  %v216 = vsel %vm109, %v201, 0
  %v219 = vsel %vm109, %v202, 0
  %221 = vmatpush.msra.mxu0 0.0
  %222 = vmatpush.msra.mxu0 0.0
  %223 = vmatpush.msra.mxu0 0.0
  %224 = vmatpush.msra.mxu0 0.0
  %225 = vmatpush.msra.mxu0 0.0
  %226 = vmatpush.msra.mxu0 0.0
  %227 = vmatpush.msra.mxu0 0.0
  %228 = vmatpush.msra.mxu0 0.0
  %229 = vmatpush.msra.mxu0 0.0
  %230 = vmatpush.msra.mxu0 0.0
  %231 = vmatpush.msra.mxu0 %v209
  %232 = vmatpush.msra.mxu0 %v208
  %233 = vmatpush.msra.mxu0 %v207
  %234 = vmatpush.msra.mxu0 %v206
  %235 = vmatpush.msra.mxu0 %v205
  %236 = vmatpush.msra.mxu0 %v204
  %237 = vmatmul.f32.gmra.mxu0 %v216
  %v238 = vpop.f32.mrf.mxu0
  %v239 = vadd.f32 %v213, %v238
  %240 = vmatmul.f32.gmra.mxu0 %v219
  %v241 = vpop.f32.mrf.mxu0
  %v242 = vadd.f32 %v213, %v241
  %243 = vdwg.mxu0
  %v244 = vtanh.pop %v239
  %v245 = vtanh.pop %v242
  %v246 = vadd.f32 %v155, %v244
  %v247 = vadd.f32 %v156, %v245
  %250 = vrot.lane.b32.xlu0 %v244, 120
  %v251 = vpop.permute.xlu0 %250
  %252 = vrot.lane.b32.xlu0 %v245, 120
  %v253 = vpop.permute.xlu0 %252
  %v256 = vsub.f32 %v145, %v251
  %v257 = vsub.f32 %v146, %v253
  %258 = vst.msk [vmem:[#allocation2] sm:$0xff] %vm41, %v246
  %259 = vst.msk [vmem:[#allocation2 + $0x8] sm:$0xff] %vm41, %v247
  %v260 = vld [vmem:[#allocation2] ss:$2 sm:$0xff]
  %s261 = scalar_lea.vmem [#allocation2], 1
  %v262 = vld [vmem:[%s261] ss:$2 sm:$0xff]
  %264 = vrot.lane.b32.xlu0 %v262, 8
  %v265 = vpop.permute.xlu0 %264
  %v267 = vsel %vm41, %v260, %v265
  %v269 = vrot.slane %v267, 7
  %v271 = vsel %vm49, 0.0, %v269
  %vm272 = vcmp.eq.s32.totalorder %v45, 4
  %vm273 = vmor %vm56, %vm272
  %v274 = vsel %vm273, 0.0, %v271
  %v275 = vrot.slane %v267, 1
  %v277 = vsel %vm64, %v275, 0.0
  %vm278 = vcmp.eq.s32.totalorder %v45, 3
  %vm279 = vmor %vm278, %vm71
  %v280 = vsel %vm279, 0.0, %v277
  %281 = vrot.lane.b32.xlu0 %v267, 16
  %v282 = vpop.permute.xlu0 %281
  %285 = vrot.lane.b32.xlu0 %v280, 32
  %v286 = vpop.permute.xlu0 %285
  %v288 = vsel %vm93, %v274, %v282
  %v289 = vsel %vm96, %v288, %v286
  %s290 = scalar_lea.vmem %s2, 96
  %v291 = vld [vmem:[%s290] sm:$0xff]
  %v292 = vld [vmem:[%s290 + $0x8] sm:$0xff]
  %v293 = vld [vmem:[%s290 + $0x10] sm:$0xff]
  %v294 = vld [vmem:[%s290 + $0x18] sm:$0xff]
  %v295 = vld [vmem:[%s290 + $0x20] sm:$0xff]
  %v296 = vld [vmem:[%s290 + $0x28] sm:$0xff]
  %s297 = scalar_lea.vmem %s3, 2
  %v298 = vld [vmem:[%s297] sm:$0x1]
  %v300 = vperm.slane %v298, 0
  %v303 = vsel %vm109, %v289, 0
  %305 = vmatpush.msra.mxu0 0.0
  %306 = vmatpush.msra.mxu0 0.0
  %307 = vmatpush.msra.mxu0 0.0
  %308 = vmatpush.msra.mxu0 0.0
  %309 = vmatpush.msra.mxu0 0.0
  %310 = vmatpush.msra.mxu0 0.0
  %311 = vmatpush.msra.mxu0 0.0
  %312 = vmatpush.msra.mxu0 0.0
  %313 = vmatpush.msra.mxu0 0.0
  %314 = vmatpush.msra.mxu0 0.0
  %315 = vmatpush.msra.mxu0 %v296
  %316 = vmatpush.msra.mxu0 %v295
  %317 = vmatpush.msra.mxu0 %v294
  %318 = vmatpush.msra.mxu0 %v293
  %319 = vmatpush.msra.mxu0 %v292
  %320 = vmatpush.msra.mxu0 %v291
  %321 = vmatmul.f32.gmra.mxu0 %v303
  %v322 = vpop.f32.mrf.mxu0
  %v323 = vadd.f32 %v300, %v322
  %324 = vdwg.mxu0
  %v325 = vtanh.pop %v323
  %v326 = vmul.f32 %v325, 1.442695
  %v327 = vpow.pop %v326
  %v328 = vmul.f32 %v262, %v327
  %330 = vrot.lane.b32.xlu0 %v327, 120
  %v331 = vpop.permute.xlu0 %330
  %v333 = vmul.f32 %v260, %v331
  %335 = vrot.lane.b32.xlu0 %v333, 8
  %v336 = vpop.permute.xlu0 %335
  %v338 = vsel %vm41, %v328, %v336
  %v340 = vrot.slane %v338, 7
  %v342 = vsel %vm49, 0.0, %v340
  %v343 = vsel %vm273, 0.0, %v342
  %v344 = vrot.slane %v338, 1
  %v346 = vsel %vm64, %v344, 0.0
  %v347 = vsel %vm279, 0.0, %v346
  %348 = vrot.lane.b32.xlu0 %v338, 16
  %v349 = vpop.permute.xlu0 %348
  %352 = vrot.lane.b32.xlu0 %v347, 32
  %v353 = vpop.permute.xlu0 %352
  %v355 = vsel %vm93, %v343, %v349
  %v356 = vsel %vm96, %v355, %v353
  %s357 = scalar_lea.vmem %s2, 144
  %v358 = vld [vmem:[%s357] sm:$0xff]
  %v359 = vld [vmem:[%s357 + $0x8] sm:$0xff]
  %v360 = vld [vmem:[%s357 + $0x10] sm:$0xff]
  %v361 = vld [vmem:[%s357 + $0x18] sm:$0xff]
  %v362 = vld [vmem:[%s357 + $0x20] sm:$0xff]
  %v363 = vld [vmem:[%s357 + $0x28] sm:$0xff]
  %s364 = scalar_lea.vmem %s3, 3
  %v365 = vld [vmem:[%s364] sm:$0x1]
  %v367 = vperm.slane %v365, 0
  %v370 = vsel %vm109, %v356, 0
  %372 = vmatpush.msra.mxu0 0.0
  %373 = vmatpush.msra.mxu0 0.0
  %374 = vmatpush.msra.mxu0 0.0
  %375 = vmatpush.msra.mxu0 0.0
  %376 = vmatpush.msra.mxu0 0.0
  %377 = vmatpush.msra.mxu0 0.0
  %378 = vmatpush.msra.mxu0 0.0
  %379 = vmatpush.msra.mxu0 0.0
  %380 = vmatpush.msra.mxu0 0.0
  %381 = vmatpush.msra.mxu0 0.0
  %382 = vmatpush.msra.mxu0 %v363
  %383 = vmatpush.msra.mxu0 %v362
  %384 = vmatpush.msra.mxu0 %v361
  %385 = vmatpush.msra.mxu0 %v360
  %386 = vmatpush.msra.mxu0 %v359
  %387 = vmatpush.msra.mxu0 %v358
  %388 = vmatmul.f32.gmra.mxu0 %v370
  %v389 = vpop.f32.mrf.mxu0
  %v390 = vadd.f32 %v367, %v389
  %391 = vdwg.mxu0
  %v392 = vtanh.pop %v390
  %v393 = vadd.f32 %v333, %v392
  %395 = vrot.lane.b32.xlu0 %v392, 120
  %v396 = vpop.permute.xlu0 %395
  %v398 = vsub.f32 %v328, %v396
  %399 = vst.msk [vmem:[#allocation2] sm:$0xff] %vm41, %v256
  %400 = vst.msk [vmem:[#allocation2 + $0x8] sm:$0xff] %vm41, %v257
  %v401 = vld [vmem:[#allocation2] ss:$2 sm:$0xff]
  %v402 = vld [vmem:[%s261] ss:$2 sm:$0xff]
  %404 = vrot.lane.b32.xlu0 %v402, 8
  %v405 = vpop.permute.xlu0 %404
  %v407 = vsel %vm41, %v401, %v405
  %v409 = vrot.slane %v407, 7
  %v411 = vsel %vm49, 0.0, %v409
  %v412 = vsel %vm273, 0.0, %v411
  %v413 = vrot.slane %v407, 1
  %v415 = vsel %vm64, %v413, 0.0
  %v416 = vsel %vm279, 0.0, %v415
  %417 = vrot.lane.b32.xlu0 %v407, 16
  %v418 = vpop.permute.xlu0 %417
  %421 = vrot.lane.b32.xlu0 %v416, 32
  %v422 = vpop.permute.xlu0 %421
  %v424 = vsel %vm93, %v412, %v418
  %v425 = vsel %vm96, %v424, %v422
  %s426 = scalar_lea.vmem %s2, 192
  %v427 = vld [vmem:[%s426] sm:$0xff]
  %v428 = vld [vmem:[%s426 + $0x8] sm:$0xff]
  %v429 = vld [vmem:[%s426 + $0x10] sm:$0xff]
  %v430 = vld [vmem:[%s426 + $0x18] sm:$0xff]
  %v431 = vld [vmem:[%s426 + $0x20] sm:$0xff]
  %v432 = vld [vmem:[%s426 + $0x28] sm:$0xff]
  %s433 = scalar_lea.vmem %s3, 4
  %v434 = vld [vmem:[%s433] sm:$0x1]
  %v436 = vperm.slane %v434, 0
  %v439 = vsel %vm109, %v425, 0
  %441 = vmatpush.msra.mxu0 0.0
  %442 = vmatpush.msra.mxu0 0.0
  %443 = vmatpush.msra.mxu0 0.0
  %444 = vmatpush.msra.mxu0 0.0
  %445 = vmatpush.msra.mxu0 0.0
  %446 = vmatpush.msra.mxu0 0.0
  %447 = vmatpush.msra.mxu0 0.0
  %448 = vmatpush.msra.mxu0 0.0
  %449 = vmatpush.msra.mxu0 0.0
  %450 = vmatpush.msra.mxu0 0.0
  %451 = vmatpush.msra.mxu0 %v432
  %452 = vmatpush.msra.mxu0 %v431
  %453 = vmatpush.msra.mxu0 %v430
  %454 = vmatpush.msra.mxu0 %v429
  %455 = vmatpush.msra.mxu0 %v428
  %456 = vmatpush.msra.mxu0 %v427
  %457 = vmatmul.f32.gmra.mxu0 %v439
  %v458 = vpop.f32.mrf.mxu0
  %v459 = vadd.f32 %v436, %v458
  %460 = vdwg.mxu0
  %v461 = vtanh.pop %v459
  %v462 = vmul.f32 %v461, 1.442695
  %v463 = vpow.pop %v462
  %v464 = vmul.f32 %v402, %v463
  %466 = vrot.lane.b32.xlu0 %v463, 120
  %v467 = vpop.permute.xlu0 %466
  %v469 = vmul.f32 %v401, %v467
  %471 = vrot.lane.b32.xlu0 %v469, 8
  %v472 = vpop.permute.xlu0 %471
  %v474 = vsel %vm41, %v464, %v472
  %v476 = vrot.slane %v474, 7
  %v478 = vsel %vm49, 0.0, %v476
  %v479 = vsel %vm273, 0.0, %v478
  %v480 = vrot.slane %v474, 1
  %v482 = vsel %vm64, %v480, 0.0
  %v483 = vsel %vm279, 0.0, %v482
  %484 = vrot.lane.b32.xlu0 %v474, 16
  %v485 = vpop.permute.xlu0 %484
  %488 = vrot.lane.b32.xlu0 %v483, 32
  %v489 = vpop.permute.xlu0 %488
  %v491 = vsel %vm93, %v479, %v485
  %v492 = vsel %vm96, %v491, %v489
  %s493 = scalar_lea.vmem %s2, 240
  %v494 = vld [vmem:[%s493] sm:$0xff]
  %v495 = vld [vmem:[%s493 + $0x8] sm:$0xff]
  %v496 = vld [vmem:[%s493 + $0x10] sm:$0xff]
  %v497 = vld [vmem:[%s493 + $0x18] sm:$0xff]
  %v498 = vld [vmem:[%s493 + $0x20] sm:$0xff]
  %v499 = vld [vmem:[%s493 + $0x28] sm:$0xff]
  %s500 = scalar_lea.vmem %s3, 5
  %v501 = vld [vmem:[%s500] sm:$0x1]
  %v503 = vperm.slane %v501, 0
  %v506 = vsel %vm109, %v492, 0
  %508 = vmatpush.msra.mxu0 0.0
  %509 = vmatpush.msra.mxu0 0.0
  %510 = vmatpush.msra.mxu0 0.0
  %511 = vmatpush.msra.mxu0 0.0
  %512 = vmatpush.msra.mxu0 0.0
  %513 = vmatpush.msra.mxu0 0.0
  %514 = vmatpush.msra.mxu0 0.0
  %515 = vmatpush.msra.mxu0 0.0
  %516 = vmatpush.msra.mxu0 0.0
  %517 = vmatpush.msra.mxu0 0.0
  %518 = vmatpush.msra.mxu0 %v499
  %519 = vmatpush.msra.mxu0 %v498
  %520 = vmatpush.msra.mxu0 %v497
  %521 = vmatpush.msra.mxu0 %v496
  %522 = vmatpush.msra.mxu0 %v495
  %523 = vmatpush.msra.mxu0 %v494
  %524 = vmatmul.f32.gmra.mxu0 %v506
  %v525 = vpop.f32.mrf.mxu0
  %v526 = vadd.f32 %v503, %v525
  %527 = vdwg.mxu0
  %v528 = vtanh.pop %v526
  %v529 = vadd.f32 %v469, %v528
  %531 = vrot.lane.b32.xlu0 %v528, 120
  %v532 = vpop.permute.xlu0 %531
  %v534 = vsub.f32 %v464, %v532
  %v535 = vld [vmem:[%s1] sm:$0xff]
  %v536 = vld [vmem:[%s1 + $0x8] sm:$0xff]
  %v537 = vld [vmem:[%s1 + $0x10] sm:$0xff]
  %v538 = vld [vmem:[%s1 + $0x18] sm:$0xff]
  %v539 = vadd.f32 %v393, %v535
  %v540 = vadd.f32 %v398, %v536
  %v541 = vadd.f32 %v529, %v537
  %v542 = vadd.f32 %v534, %v538
  %v543 = vld [vmem:[%s4] sm:$0xff]
  %v544 = vld [vmem:[%s4 + $0x8] sm:$0xff]
  %v545 = vld [vmem:[%s4 + $0x10] sm:$0xff]
  %v546 = vld [vmem:[%s4 + $0x18] sm:$0xff]
  %v548 = vsel %vm96, %v543, 0
  %v551 = vsel %vm96, %v544, 0
  %v554 = vsel %vm96, %v545, 0
  %v557 = vsel %vm96, %v546, 0
  %559 = vmatpush.msra.mxu0 0.0
  %560 = vmatpush.msra.mxu0 0.0
  %561 = vmatpush.msra.mxu0 0.0
  %562 = vmatpush.msra.mxu0 0.0
  %563 = vmatpush.msra.mxu0 0.0
  %564 = vmatpush.msra.mxu0 0.0
  %565 = vmatpush.msra.mxu0 0.0
  %566 = vmatpush.msra.mxu0 0.0
  %567 = vmatpush.msra.mxu0 0.0
  %568 = vmatpush.msra.mxu0 0.0
  %569 = vmatpush.msra.mxu0 0.0
  %570 = vmatpush.msra.mxu0 0.0
  %571 = vmatpush.msra.mxu0 %v542
  %572 = vmatpush.msra.mxu0 %v541
  %573 = vmatpush.msra.mxu0 %v540
  %574 = vmatpush.msra.mxu0 %v539
  %575 = vmatmul.f32.gmra.mxu0 %v548
  %v576 = vpop.f32.mrf.mxu0
  %v577 = vadd.f32 0.0, %v576
  %578 = vmatmul.f32.gmra.mxu0 %v551
  %v579 = vpop.f32.mrf.mxu0
  %v580 = vadd.f32 0.0, %v579
  %581 = vmatmul.f32.gmra.mxu0 %v554
  %v582 = vpop.f32.mrf.mxu0
  %v583 = vadd.f32 0.0, %v582
  %584 = vmatmul.f32.gmra.mxu0 %v557
  %v585 = vpop.f32.mrf.mxu0
  %v586 = vadd.f32 0.0, %v585
  %587 = vdwg.mxu0
  %v588 = vld [vmem:[%s5] sm:$0xff]
  %v589 = vld [vmem:[%s6] sm:$0x1]
  %v591 = vperm.slane %v589, 0
  %v594 = vsel %vm41, %v577, 0
  %v597 = vsel %vm41, %v580, 0
  %v600 = vsel %vm41, %v583, 0
  %v603 = vsel %vm41, %v586, 0
  %605 = vmatpush.msra.mxu0 0.0
  %606 = vmatpush.msra.mxu0 0.0
  %607 = vmatpush.msra.mxu0 0.0
  %608 = vmatpush.msra.mxu0 0.0
  %609 = vmatpush.msra.mxu0 0.0
  %610 = vmatpush.msra.mxu0 0.0
  %611 = vmatpush.msra.mxu0 0.0
  %612 = vmatpush.msra.mxu0 0.0
  %613 = vmatpush.msra.mxu0 0.0
  %614 = vmatpush.msra.mxu0 0.0
  %615 = vmatpush.msra.mxu0 0.0
  %616 = vmatpush.msra.mxu0 0.0
  %617 = vmatpush.msra.mxu0 0.0
  %618 = vmatpush.msra.mxu0 0.0
  %619 = vmatpush.msra.mxu0 0.0
  %620 = vmatpush.msra.mxu0 %v588
  %621 = vmatmul.f32.gmra.mxu0 %v594
  %v622 = vpop.f32.mrf.mxu0
  %v623 = vadd.f32 %v591, %v622
  %624 = vmatmul.f32.gmra.mxu0 %v597
  %v625 = vpop.f32.mrf.mxu0
  %v626 = vadd.f32 %v591, %v625
  %627 = vmatmul.f32.gmra.mxu0 %v600
  %v628 = vpop.f32.mrf.mxu0
  %v629 = vadd.f32 %v591, %v628
  %630 = vmatmul.f32.gmra.mxu0 %v603
  %v631 = vpop.f32.mrf.mxu0
  %v632 = vadd.f32 %v591, %v631
  %633 = vdwg.mxu0
  %634 = vst.msk [vmem:[%s7] sm:$0xff] %vm41, %v623
  %635 = vst.msk [vmem:[%s7 + $0x8] sm:$0xff] %vm41, %v626
  %636 = vst.msk [vmem:[%s7 + $0x10] sm:$0xff] %vm41, %v629
  %637 = vst.msk [vmem:[%s7 + $0x18] sm:$0xff] %vm41, %v632
  // Predicated region
  $region30: #{construction_model_forward.1} parent=0 // pred_check
    _
  $region31: #{construction_model_forward.1} parent=0 // pred_check_branch
    %639 = sbr.rel (0) target = $region33
  $region32: #{construction_model_forward.1} parent=0 // pred_region
    _
  $region33: #{construction_model_forward.1} parent=0 // pred_fallthru
    _
  // Predicated region
  $region34: #{construction_model_forward.1} parent=0 // pred_check
    _
  $region35: #{construction_model_forward.1} parent=0 // pred_check_branch
    %641 = sbr.rel (0) target = $region37
  $region36: #{construction_model_forward.1} parent=0 // pred_region
    _
  $region37: #{construction_model_forward.1} parent=0 // pred_fallthru
    _

</llo_original>
